<compile_context>
chip_gen: v7x
topology: tpu7x:2x2x1
jax: 0.10.0
libtpu: 0.0.40
codegen_flags: <defaults>
</compile_context>

<pallas_src>
from functools import partial

import jax
import jax.numpy as jnp
from jax.experimental import pallas as pl
from jax.experimental.pallas import tpu as pltpu


# ----------------------------------------------------------------------------
# Python-side mirror of the registry behaviour (__init_subclass__ -> Config).
# ----------------------------------------------------------------------------
class Config:
    global_dict = {"model": {}}


class AggregatorBuilder:
    """JAX/Pallas mirror of the abstract PyTorch AggregatorBuilder."""

    def __init__(self, conf):
        self.conf = conf

    def __init_subclass__(cls, **kwargs):
        super().__init_subclass__(**kwargs)
        Config.global_dict["model"][str(cls.__name__)] = cls

    def forward(self, x):
        raise NotImplementedError

    def __call__(self, x):
        return self.forward(x)


# ----------------------------------------------------------------------------
# Pallas kernel: identity pass-through of a lane-dense (rows, 1024) slab.
# ----------------------------------------------------------------------------
_LANES = 1024                 # lane-dense width: multiple of 128, 8 vregs wide
_TARGET_BLOCK_BYTES = 1 << 20  # ~1 MiB per block; 2 bufs x (in+out) = 4 MiB VMEM


def _identity_kernel(x_ref, o_ref):
    # Whole-tile load + store; with I/O aliasing this writes the same values
    # back into the same HBM buffer through the pipelined VMEM tile.
    o_ref[...] = x_ref[...]


def _round_up(n, m):
    return -(-n // m) * m


@jax.jit
def _identity_forward(x):
    dtype = x.dtype
    total = x.size
    itemsize = jnp.dtype(dtype).itemsize

    # Rows of the lane-dense slab (pad flat data up to a whole number of rows).
    rows = _round_up(total, _LANES) // _LANES

    # Largest multiple-of-8 row tile whose block is ~1 MiB (256 rows for f32),
    # clamped to the (8-padded) number of rows actually present.
    target_rows = max(8, (_TARGET_BLOCK_BYTES // (_LANES * itemsize)) // 8 * 8)
    tile_r = min(target_rows, _round_up(rows, 8))
    rows_padded = _round_up(rows, tile_r)
    padded_total = rows_padded * _LANES

    flat = x.reshape(-1)
    if padded_total != total:
        flat = jnp.pad(flat, (0, padded_total - total))
    x2d = flat.reshape(rows_padded, _LANES)

    grid = (rows_padded // tile_r,)
    semantics = ("parallel",) if grid[0] > 1 else ("arbitrary",)

    y2d = pl.pallas_call(
        _identity_kernel,
        out_shape=jax.ShapeDtypeStruct((rows_padded, _LANES), dtype),
        grid_spec=pltpu.PrefetchScalarGridSpec(
            num_scalar_prefetch=0,
            grid=grid,
            in_specs=[pl.BlockSpec((tile_r, _LANES), lambda i: (i, 0))],
            out_specs=pl.BlockSpec((tile_r, _LANES), lambda i: (i, 0)),
        ),
        compiler_params=pltpu.CompilerParams(dimension_semantics=semantics),
        # Output aliases the input slab (an intermediate inside this jit), so
        # no second HBM buffer is allocated for the result.
        input_output_aliases={0: 0},
    )(x2d)

    return y2d.reshape(-1)[:total].reshape(x.shape)


# ----------------------------------------------------------------------------
# A concrete subclass (registers itself, like PyTorch subclasses would) whose
# forward is the identity implemented with the Pallas kernel above.
# ----------------------------------------------------------------------------
class IdentityAggregator(AggregatorBuilder):
    def forward(self, x):
        return _identity_forward(x)


if __name__ == "__main__":
    key = jax.random.PRNGKey(0)
    # Small NCHW input consistent with a conv-style model: batch=2, ch=4, 16x16.
    x = jax.random.normal(key, (2, 4, 16, 16), dtype=jnp.float32)

    # Base class semantics: forward raises NotImplementedError.
    base = AggregatorBuilder(conf={})
    try:
        base(x)
        raise AssertionError("base forward should have raised")
    except NotImplementedError:
        pass

    # Subclass registration semantics (__init_subclass__ -> Config.global_dict).
    assert Config.global_dict["model"]["IdentityAggregator"] is IdentityAggregator

    # Run the Pallas kernel through the concrete subclass.
    agg = IdentityAggregator(conf={})
    y = agg(x)
    jax.block_until_ready(y)

    assert y.shape == x.shape and y.dtype == x.dtype
    assert bool(jnp.allclose(y, x))

    print("KERNEL_OK")
</pallas_src>

<mosaic_0001>
module attributes {stable_mosaic.version = 11 : i64} {
  func.func @_identity_kernel(%arg0: i32, %arg1: memref<8x1024xf32, #tpu.memory_space<vmem>>, %arg2: memref<8x1024xf32, #tpu.memory_space<vmem>>) attributes {dimension_semantics = [#tpu.dimension_semantics<arbitrary>], iteration_bounds = array<i64: 1>, scalar_prefetch = 0 : i64, scratch_operands = 0 : i64, tpu.core_type = #tpu.core_type<tc>, window_params = [{transform_indices = @transform_0, window_bounds = array<i64: 8, 1024>}, {transform_indices = @transform_1, window_bounds = array<i64: 8, 1024>}]} {
    %c0 = arith.constant 0 : index
    %c0_0 = arith.constant 0 : index
    %0 = vector.load %arg1[%c0, %c0_0] : memref<8x1024xf32, #tpu.memory_space<vmem>>, vector<8x1024xf32>
    %c0_1 = arith.constant 0 : index
    %c0_2 = arith.constant 0 : index
    %1 = vector.load %arg2[%c0_1, %c0_2] : memref<8x1024xf32, #tpu.memory_space<vmem>>, vector<8x1024xf32>
    tpu.vector_store %arg2[%c0_1, %c0_2], %0 {strides = array<i32>} : memref<8x1024xf32, #tpu.memory_space<vmem>>, vector<8x1024xf32>,
    return
  }
  func.func @transform_0(%arg0: i32) -> (i32, i32) {
    %c0_i32 = arith.constant 0 : i32
    %c0_i32_0 = arith.constant 0 : i32
    return %arg0, %c0_i32 : i32, i32
  }
  func.func @transform_1(%arg0: i32) -> (i32, i32) {
    %c0_i32 = arith.constant 0 : i32
    %c0_i32_0 = arith.constant 0 : i32
    return %arg0, %c0_i32 : i32, i32
  }
}

</mosaic_0001>

<llo_original>
// kernel: _identity_forward.1
$region0: #{_identity_forward.1}
  #allocation0 [shape = 'u32[]', space=smem, size = 0x4, offset = 0x4, fixed_abs, tag = 'smem constant byte address 0x4 - core index']
  #allocation1 [shape = 'u32[144,128]{1,0:T(1,128)}', space=vmem, size = 0x12000, scoped, tag = 'internal scratch']
  %s0 = inlined_call_operand.vmem [shape: f32[8,1024], index: 0, kind: input, shape index: {}, may-alias: {0,1}]
  %s1 = inlined_call_operand.vmem [shape: f32[8,1024], index: 1, kind: output, shape index: {}, may-alias: {0,1}]
  %s2 = sld [smem:[#allocation0]]
  $region14: #{_identity_forward.1} parent=0
    _
  %s4 = ssub.s32 1, %s2
  %s5 = scalar_select 0, %s4, %s2
  // Predicated region
  $region2: #{_identity_forward.1} parent=0 // pred_check
    _
  $region3: #{_identity_forward.1} parent=0 // pred_check_branch
    %7 = sbr.rel (0) target = $region5
  $region4: #{_identity_forward.1} parent=0 // pred_region
    _
  $region5: #{_identity_forward.1} parent=0 // pred_fallthru
    _
  %v8 = vld [vmem:[%s0] sm:$0xff]
  %v9 = vld [vmem:[%s0 + $0x8] sm:$0xff]
  %v10 = vld [vmem:[%s0 + $0x10] sm:$0xff]
  %v11 = vld [vmem:[%s0 + $0x18] sm:$0xff]
  %v12 = vld [vmem:[%s0 + $0x20] sm:$0xff]
  %v13 = vld [vmem:[%s0 + $0x28] sm:$0xff]
  %v14 = vld [vmem:[%s0 + $0x30] sm:$0xff]
  %v15 = vld [vmem:[%s0 + $0x38] sm:$0xff]
  %16 = vst [vmem:[%s1] sm:$0xff] %v8
  %17 = vst [vmem:[%s1 + $0x8] sm:$0xff] %v9
  %18 = vst [vmem:[%s1 + $0x10] sm:$0xff] %v10
  %19 = vst [vmem:[%s1 + $0x18] sm:$0xff] %v11
  %20 = vst [vmem:[%s1 + $0x20] sm:$0xff] %v12
  %21 = vst [vmem:[%s1 + $0x28] sm:$0xff] %v13
  %22 = vst [vmem:[%s1 + $0x30] sm:$0xff] %v14
  %23 = vst [vmem:[%s1 + $0x38] sm:$0xff] %v15
  // Predicated region
  $region6: #{_identity_forward.1} parent=0 // pred_check
    _
  $region7: #{_identity_forward.1} parent=0 // pred_check_branch
    %25 = sbr.rel (0) target = $region9
  $region8: #{_identity_forward.1} parent=0 // pred_region
    _
  $region9: #{_identity_forward.1} parent=0 // pred_fallthru
    _
  // Predicated region
  $region10: #{_identity_forward.1} parent=0 // pred_check
    _
  $region11: #{_identity_forward.1} parent=0 // pred_check_branch
    %27 = sbr.rel (0) target = $region13
  $region12: #{_identity_forward.1} parent=0 // pred_region
    _
  $region13: #{_identity_forward.1} parent=0 // pred_fallthru
    _

</llo_original>
